<compile_context>
chip_gen: v7x
topology: tpu7x:2x2x1
jax: 0.10.0
libtpu: 0.0.40
codegen_flags: <defaults>
</compile_context>

<pallas_src>
import numpy as np
import jax
import jax.numpy as jnp
from jax.experimental import pallas as pl
from jax.experimental.pallas import tpu as pltpu


def _pick_block_batch(n):
    """Images per grid step: amortize ~0.35us/step overhead, keep >=2 steps for v7x 2-TC."""
    for b in (8, 4, 2):
        if n % b == 0 and n // b >= 2:
            return b
    return 1


def _make_kernel(B, H, W, Cin, Cout, withbn, compute_dtype, leak=0.2, eps=1e-5):
    Ho, Wo = H - 2, W - 2          # valid 3x3 conv output size
    Wp = Wo * Cout                 # lane-dense conv-output width
    inv_n = 1.0 / float(H * W)     # InstanceNorm averages over the PADDED map

    def kernel(x_ref, w_ref, o_ref):
        # x_ref: (B, H, W*Cin)   w_ref: (3, W*Cin, Wo*Cout) [compute_dtype]   o_ref: (B, H, W*Cout)

        if withbn:
            # Multiplicity of each conv-output row/col inside the reflection-padded map:
            # rows/cols 1 and Ho-2 / Wo-2 appear twice extra via the reflection.
            ri = jax.lax.broadcasted_iota(jnp.int32, (1, Ho), 1)
            rw = (1.0 + (ri == 1).astype(jnp.float32)
                  + (ri == Ho - 2).astype(jnp.float32))                      # (1, Ho)
            # Column-weighted channel-reduction matrix: cred[wo*Cout+co, c] = cw[wo]*(co==c)
            ji = jax.lax.broadcasted_iota(jnp.int32, (Wp, Cout), 0)
            ci = jax.lax.broadcasted_iota(jnp.int32, (Wp, Cout), 1)
            wo_j = ji // Cout
            cw = (1.0 + (wo_j == 1).astype(jnp.float32)
                  + (wo_j == Wo - 2).astype(jnp.float32))
            cred = jnp.where((ji % Cout) == ci, cw, 0.0)                     # (Wp, Cout)

        for b in range(B):  # small, unrolled
            xb = x_ref[b].astype(compute_dtype)                              # (H, W*Cin)

            # ---- conv: 3 lane-dense banded matmuls (one per dy), f32 accumulate ----
            acc = None
            for dy in range(3):
                part = jax.lax.dot_general(
                    xb[dy:dy + Ho, :], w_ref[dy],
                    (((1,), (0,)), ((), ())),
                    preferred_element_type=jnp.float32)                      # (Ho, Wp)
                acc = part if acc is None else acc + part

            # ---- InstanceNorm2d (affine=False, eps=1e-5) over the PADDED map ----
            if withbn:
                s1 = jax.lax.dot_general(rw, acc, (((1,), (0,)), ((), ())),
                                         preferred_element_type=jnp.float32)       # (1, Wp)
                s2 = jax.lax.dot_general(rw, acc * acc, (((1,), (0,)), ((), ())),
                                         preferred_element_type=jnp.float32)       # (1, Wp)
                sums = jax.lax.dot_general(jnp.concatenate([s1, s2], axis=0), cred,
                                           (((1,), (0,)), ((), ())),
                                           preferred_element_type=jnp.float32)     # (2, Cout)
                mean = sums[0:1, :] * inv_n
                ex2 = sums[1:2, :] * inv_n
                var = ex2 - mean * mean
                inv_std = jax.lax.rsqrt(var + eps)                                 # (1, Cout)
                acc = (acc - jnp.tile(mean, (1, Wo))) * jnp.tile(inv_std, (1, Wo))

            # ---- LeakyReLU(0.2), lane-dense (commutes with the pad copy) ----
            y = jnp.where(acc >= 0, acc, leak * acc).astype(o_ref.dtype)     # (Ho, Wp)

            # ---- ReflectionPad2d(1): assemble (H, W*Cout) and store once ----
            left = y[:, Cout:2 * Cout]                                       # conv column 1
            right = y[:, (Wo - 2) * Cout:(Wo - 1) * Cout]                    # conv column Wo-2
            rows = jnp.concatenate([left, y, right], axis=1)                 # (Ho, W*Cout)
            full = jnp.concatenate(
                [rows[1:2, :], rows, rows[Ho - 2:Ho - 1, :]], axis=0)        # (H, W*Cout)
            o_ref[b] = full

    return kernel


def conv_relu_pallas(x_nchw, weight_oihw, withbn=False,
                     compute_dtype=jnp.bfloat16, block_batch=None):
    """x_nchw: (N, Cin, H, W); weight_oihw: (Cout, Cin, 3, 3). Returns (N, Cout, H, W).

    compute_dtype=jnp.bfloat16 (default) feeds the MXU bf16 operands with f32 accumulation;
    pass jnp.float32 for bit-for-bit-style parity with the PyTorch/f32 reference.
    """
    N, Cin, H, W = x_nchw.shape
    Cout, Cin_w, KH, KW = weight_oihw.shape
    assert (KH, KW) == (3, 3) and Cin_w == Cin
    assert H >= 4 and W >= 4, "ReflectionPad2d(1) after a valid 3x3 conv needs H, W >= 4"

    Ho, Wo = H - 2, W - 2
    Wp = Wo * Cout

    B = _pick_block_batch(N) if block_batch is None else block_batch
    assert N % B == 0, "block_batch must divide N"

    # Lane-dense input: (N, H, W*Cin)  (free reshape of NHWC)
    x_flat = jnp.transpose(x_nchw, (0, 2, 3, 1)).reshape(N, H, W * Cin)

    # Banded conv weight, built once: wband[dy, w*Cin+ci, wo*Cout+co] = weight[co,ci,dy,dx]
    # iff w == wo + dx.  Pre-cast to compute_dtype so the kernel never re-casts it.
    w_t = jnp.transpose(weight_oihw, (2, 3, 1, 0))                  # (dy, dx, ci, co)
    sel = np.zeros((3, W, Wo), dtype=np.float32)
    for dx in range(3):
        sel[dx, np.arange(Wo) + dx, np.arange(Wo)] = 1.0            # sel[dx, wo+dx, wo] = 1
    wband = (jnp.einsum('abc,daef->dbecf', sel, w_t)                # (3, W, Cin, Wo, Cout)
             .reshape(3, W * Cin, Wp).astype(compute_dtype))

    kernel = _make_kernel(B, H, W, Cin, Cout, withbn, compute_dtype)

    elt = jnp.dtype(x_flat.dtype).itemsize
    cd = jnp.dtype(compute_dtype).itemsize
    flops = 2 * N * 3 * Ho * (W * Cin) * Wp + 8 * N * H * W * Cout
    if withbn:
        flops += 2 * N * (2 * Ho * Wp + 2 * Wp * Cout)
    bytes_accessed = x_flat.size * elt + wband.size * cd + N * H * W * Cout * elt
    cost = pl.CostEstimate(flops=flops,
                           transcendentals=(N * Cout if withbn else 0),
                           bytes_accessed=bytes_accessed)

    # Honest per-step working set: double-buffered x / weight / out blocks + in-kernel
    # intermediates (compute-dtype LHS, f32 acc & friends, padded assembly).
    ws = (2 * B * H * W * Cin * elt
          + 2 * 3 * W * Cin * Wp * cd
          + 2 * B * H * W * Cout * elt
          + B * (H * W * Cin * cd + 6 * Ho * Wp * 4 + 2 * H * W * Cout * elt))
    vmem_limit = int(min(48 * 2**20, max(32 * 2**20, 2 * ws)))

    out_flat = pl.pallas_call(
        kernel,
        out_shape=jax.ShapeDtypeStruct((N, H, W * Cout), x_flat.dtype),
        grid_spec=pltpu.PrefetchScalarGridSpec(
            num_scalar_prefetch=0,
            grid=(N // B,),
            in_specs=[
                pl.BlockSpec((B, H, W * Cin), lambda n: (n, 0, 0)),
                pl.BlockSpec((3, W * Cin, Wp), lambda n: (0, 0, 0)),
            ],
            out_specs=pl.BlockSpec((B, H, W * Cout), lambda n: (n, 0, 0)),
        ),
        compiler_params=pltpu.CompilerParams(
            dimension_semantics=("parallel",),
            vmem_limit_bytes=vmem_limit,
        ),
        cost_estimate=cost,
    )(x_flat, wband)

    # (N, H, W*Cout) -> (N, H, W, Cout) -> NCHW
    return jnp.transpose(out_flat.reshape(N, H, W, Cout), (0, 3, 1, 2))


def conv_relu_reference(x_nchw, weight_oihw, withbn=False, leak=0.2, eps=1e-5):
    """Plain-JAX reference matching the PyTorch module (conv -> reflect pad -> [IN] -> LeakyReLU)."""
    y = jax.lax.conv_general_dilated(
        x_nchw, weight_oihw,
        window_strides=(1, 1), padding="VALID",
        dimension_numbers=("NCHW", "OIHW", "NCHW"),
    )
    y = jnp.pad(y, ((0, 0), (0, 0), (1, 1), (1, 1)), mode="reflect")
    if withbn:
        mean = jnp.mean(y, axis=(2, 3), keepdims=True)
        var = jnp.mean((y - mean) ** 2, axis=(2, 3), keepdims=True)
        y = (y - mean) * jax.lax.rsqrt(var + eps)
    return jnp.where(y >= 0, y, leak * y)


if __name__ == "__main__":
    N, Cin, Cout, H, W = 2, 4, 8, 16, 16
    key = jax.random.PRNGKey(0)
    kx, kw = jax.random.split(key)

    x = jax.random.normal(kx, (N, Cin, H, W), dtype=jnp.float32)
    # Deterministic Kaiming-uniform-like init for the conv weight (bias=False).
    fan_in = Cin * 3 * 3
    bound = 1.0 / (fan_in ** 0.5)
    weight = jax.random.uniform(
        kw, (Cout, Cin, 3, 3), dtype=jnp.float32, minval=-bound, maxval=bound
    )

    ok = True
    for withbn in (False, True):
        ref = conv_relu_reference(x, weight, withbn=withbn)

        # Strict f32 compute path.
        out_f32 = conv_relu_pallas(x, weight, withbn=withbn, compute_dtype=jnp.float32)
        out_f32 = jax.block_until_ready(out_f32)
        assert out_f32.shape == (N, Cout, H, W)
        ok &= bool(jnp.allclose(out_f32, ref, rtol=1e-4, atol=1e-4))

        # Default bf16-MXU path (f32 accumulation): looser tolerance for bf16 operand rounding.
        out_bf16 = conv_relu_pallas(x, weight, withbn=withbn)
        out_bf16 = jax.block_until_ready(out_bf16)
        ok &= bool(jnp.allclose(out_bf16, ref, rtol=5e-2, atol=5e-2))

    assert ok, "mismatch vs JAX reference"
    print("KERNEL_OK")
</pallas_src>

<mosaic_0001>
module attributes {stable_mosaic.version = 11 : i64} {
  func.func @kernel(%arg0: i32, %arg1: memref<1x16x64xf32, #tpu.memory_space<vmem>>, %arg2: memref<3x64x112xf32, #tpu.memory_space<vmem>>, %arg3: memref<1x16x128xf32, #tpu.memory_space<vmem>>) attributes {dimension_semantics = [#tpu.dimension_semantics<parallel>], iteration_bounds = array<i64: 2>, scalar_prefetch = 0 : i64, scratch_operands = 0 : i64, tpu.core_type = #tpu.core_type<tc>, window_params = [{transform_indices = @transform_0, window_bounds = array<i64: 1, 16, 64>}, {pipeline_mode = #tpu.pipeline_mode<synchronous>, transform_indices = @transform_1, window_bounds = array<i64: 3, 64, 112>}, {transform_indices = @transform_2, window_bounds = array<i64: 1, 16, 128>}]} {
    %c0 = arith.constant 0 : index
    %c0_0 = arith.constant 0 : index
    %c0_1 = arith.constant 0 : index
    %0 = vector.load %arg1[%c0, %c0_0, %c0_1] : memref<1x16x64xf32, #tpu.memory_space<vmem>>, vector<1x16x64xf32>
    %1 = vector.shape_cast %0 : vector<1x16x64xf32> to vector<16x64xf32>
    %2 = vector.extract_strided_slice %1 {offsets = [0, 0], sizes = [14, 64], strides = [1, 1]} : vector<16x64xf32> to vector<14x64xf32>
    %c0_2 = arith.constant 0 : index
    %c0_3 = arith.constant 0 : index
    %c0_4 = arith.constant 0 : index
    %3 = vector.load %arg2[%c0_2, %c0_3, %c0_4] : memref<3x64x112xf32, #tpu.memory_space<vmem>>, vector<1x64x112xf32>
    %4 = vector.shape_cast %3 : vector<1x64x112xf32> to vector<64x112xf32>
    %cst = arith.constant dense<0.000000e+00> : vector<14x112xf32>
    %5 = tpu.matmul %2, %4, %cst {dimension_numbers = #tpu.dot_dimension_numbers<[1], [0], [0], [1], [0, 0, 1, 1], [], []>} : vector<14x64xf32>, vector<64x112xf32>, vector<14x112xf32> -> vector<14x112xf32>
    %6 = vector.extract_strided_slice %1 {offsets = [1, 0], sizes = [14, 64], strides = [1, 1]} : vector<16x64xf32> to vector<14x64xf32>
    %c1 = arith.constant 1 : index
    %c0_5 = arith.constant 0 : index
    %c0_6 = arith.constant 0 : index
    %7 = vector.load %arg2[%c1, %c0_5, %c0_6] : memref<3x64x112xf32, #tpu.memory_space<vmem>>, vector<1x64x112xf32>
    %8 = vector.shape_cast %7 : vector<1x64x112xf32> to vector<64x112xf32>
    %cst_7 = arith.constant dense<0.000000e+00> : vector<14x112xf32>
    %9 = tpu.matmul %6, %8, %cst_7 {dimension_numbers = #tpu.dot_dimension_numbers<[1], [0], [0], [1], [0, 0, 1, 1], [], []>} : vector<14x64xf32>, vector<64x112xf32>, vector<14x112xf32> -> vector<14x112xf32>
    %10 = arith.addf %5, %9 : vector<14x112xf32>
    %11 = vector.extract_strided_slice %1 {offsets = [2, 0], sizes = [14, 64], strides = [1, 1]} : vector<16x64xf32> to vector<14x64xf32>
    %c2 = arith.constant 2 : index
    %c0_8 = arith.constant 0 : index
    %c0_9 = arith.constant 0 : index
    %12 = vector.load %arg2[%c2, %c0_8, %c0_9] : memref<3x64x112xf32, #tpu.memory_space<vmem>>, vector<1x64x112xf32>
    %13 = vector.shape_cast %12 : vector<1x64x112xf32> to vector<64x112xf32>
    %cst_10 = arith.constant dense<0.000000e+00> : vector<14x112xf32>
    %14 = tpu.matmul %11, %13, %cst_10 {dimension_numbers = #tpu.dot_dimension_numbers<[1], [0], [0], [1], [0, 0, 1, 1], [], []>} : vector<14x64xf32>, vector<64x112xf32>, vector<14x112xf32> -> vector<14x112xf32>
    %15 = arith.addf %10, %14 : vector<14x112xf32>
    %cst_11 = arith.constant 0.000000e+00 : f32
    %16 = vector.broadcast %cst_11 : f32 to vector<14x112xf32>
    %17 = arith.cmpf oge, %15, %16 : vector<14x112xf32>
    %cst_12 = arith.constant 2.000000e-01 : f32
    %18 = vector.broadcast %cst_12 : f32 to vector<14x112xf32>
    %19 = arith.mulf %18, %15 : vector<14x112xf32>
    %20 = arith.select %17, %15, %19 : vector<14x112xi1>, vector<14x112xf32>
    %21 = vector.extract_strided_slice %20 {offsets = [0, 8], sizes = [14, 8], strides = [1, 1]} : vector<14x112xf32> to vector<14x8xf32>
    %22 = vector.extract_strided_slice %20 {offsets = [0, 96], sizes = [14, 8], strides = [1, 1]} : vector<14x112xf32> to vector<14x8xf32>
    %23 = tpu.concatenate %21, %20, %22 in 1 : vector<14x8xf32>, vector<14x112xf32>, vector<14x8xf32> -> vector<14x128xf32>
    %24 = vector.extract_strided_slice %23 {offsets = [1, 0], sizes = [1, 128], strides = [1, 1]} : vector<14x128xf32> to vector<1x128xf32>
    %25 = vector.extract_strided_slice %23 {offsets = [12, 0], sizes = [1, 128], strides = [1, 1]} : vector<14x128xf32> to vector<1x128xf32>
    %26 = tpu.concatenate %24, %23, %25 in 0 : vector<1x128xf32>, vector<14x128xf32>, vector<1x128xf32> -> vector<16x128xf32>
    %c0_13 = arith.constant 0 : index
    %c0_14 = arith.constant 0 : index
    %c0_15 = arith.constant 0 : index
    %27 = vector.load %arg3[%c0_13, %c0_14, %c0_15] : memref<1x16x128xf32, #tpu.memory_space<vmem>>, vector<1x16x128xf32>
    %28 = vector.shape_cast %27 : vector<1x16x128xf32> to vector<16x128xf32>
    %29 = vector.shape_cast %26 : vector<16x128xf32> to vector<1x16x128xf32>
    tpu.vector_store %arg3[%c0_13, %c0_14, %c0_15], %29 {strides = array<i32>} : memref<1x16x128xf32, #tpu.memory_space<vmem>>, vector<1x16x128xf32>,
    return
  }
  func.func @transform_0(%arg0: i32) -> (i32, i32, i32) {
    %c0_i32 = arith.constant 0 : i32
    %c0_i32_0 = arith.constant 0 : i32
    %c0_i32_1 = arith.constant 0 : i32
    return %arg0, %c0_i32, %c0_i32_0 : i32, i32, i32
  }
  func.func @transform_1(%arg0: i32) -> (i32, i32, i32) {
    %c0_i32 = arith.constant 0 : i32
    %c0_i32_0 = arith.constant 0 : i32
    %c0_i32_1 = arith.constant 0 : i32
    %c0_i32_2 = arith.constant 0 : i32
    return %c0_i32, %c0_i32_0, %c0_i32_1 : i32, i32, i32
  }
  func.func @transform_2(%arg0: i32) -> (i32, i32, i32) {
    %c0_i32 = arith.constant 0 : i32
    %c0_i32_0 = arith.constant 0 : i32
    %c0_i32_1 = arith.constant 0 : i32
    return %arg0, %c0_i32, %c0_i32_0 : i32, i32, i32
  }
}

</mosaic_0001>

<llo_original>
// kernel: tpu_custom_call.1
$region0: #{tpu_custom_call.1}
  #allocation0 [shape = 'u32[]', space=smem, size = 0x4, offset = 0x4, fixed_abs, tag = 'smem constant byte address 0x4 - core index']
  #allocation1 [shape = 'u32[144,128]{1,0:T(1,128)}', space=vmem, size = 0x12000, scoped, tag = 'internal scratch']
  %s0 = inlined_call_operand.hbm [shape: f32[2,16,64], index: 0, kind: input, shape index: {}]
  %s1 = inlined_call_operand.hbm [shape: f32[3,64,112], index: 1, kind: input, shape index: {}]
  %s2 = inlined_call_operand.hbm [shape: f32[2,16,128], index: 2, kind: output, shape index: {}]
  %s3 = sld [smem:[#allocation0]]
  $region49: #{tpu_custom_call.1} parent=0
    _
  %s5 = ssub.s32 1, %s3
  %s6 = scalar_select 0, %s5, %s3
  $region1: #{tpu_custom_call.1} parent=0
    #allocation2 [shape = 'u8[16384]{0}', space=vmem, size = 0x4000, scoped, tag = 'input window, operand 0']
    #allocation3 [shape = 's32[2]{0}', space=sflag, size = 0x8, scoped, tag = 'scoped memory for tpu_custom_call.1']
    #allocation4 [shape = 's32[2]{0}', space=sflag, size = 0x8, scoped, tag = 'scoped memory for tpu_custom_call.1']
    #allocation5 [shape = 'u8[98304]{0}', space=vmem, size = 0x18000, scoped, tag = 'input window, operand 1, single buffered']
    #allocation6 [shape = 's32[1]{0}', space=sflag, size = 0x4, scoped, tag = 'scoped memory for tpu_custom_call.1']
    #allocation7 [shape = 'u8[16384]{0}', space=vmem, size = 0x4000, scoped, tag = 'output window, operand 0']
    %7 = vsyncpa [#allocation3], 0
    %s8 = scalar_lea.sflag [#allocation3], 1
    %9 = vsyncpa %s8, 0
    %10 = vsyncpa [#allocation6], 0
    %11 = vsyncpa [#allocation4], 0
    %s12 = scalar_lea.sflag [#allocation4], 1
    %13 = vsyncpa %s12, 0
    loop: start=0, step=1, limit=4
    $region2: #{tpu_custom_call.1} parent=1 // loop_pre_header
      _
    $region3: #{tpu_custom_call.1} parent=1 // loop_header
      %s15 = sphi 0, %s19
      %p16 = scmp.ge.s32.totalorder %s15, 4
      %s25 = sphi 0, %s27
      %s28 = sphi 0, %s25
      %s29 = sphi 0, %s28
      %s45 = sphi 0, %s29
      %s49 = sphi 0, %s49
      %s51 = sphi 0, %s49
      %s52 = sphi 0, %s51
      %s66 = sphi 0, %s52
      %s72 = sphi 0, %s74
      %s75 = sphi 0, %s72
      %s76 = sphi 0, %s75
      %s92 = sphi 0, %s76
    $region4: #{tpu_custom_call.1} parent=1 // loop_header_branch
      %18 = sbr.rel (%p16) target = $region8
    $region5: #{tpu_custom_call.1} parent=1 // loop_body
      %s20 = ssub.s32 %s15, 1
      %s21 = ssub.s32 %s15, 2
      %s22 = sadd.s32 %s15, 1
      %s23 = ssub.s32 %s15, %s22
      %p24 = scmp.eq.s32.totalorder %s23, 0
      %s26 = sadd.s32 %s25, 1
      %s27 = scalar_select %p24, %s25, %s26
      %p30 = pneg %p24
      %p31 = scmp.eq.s32.totalorder %s15, 1
      %p32 = por %p30, %p31
      %p33 = scmp.ne.s32.totalorder %s25, %s28
      %p34 = scmp.eq.s32.totalorder %s15, 0
      %p35 = por %p33, %p34
      %p36 = scmp.ne.s32.totalorder %s25, %s28
      %p37 = scmp.eq.s32.totalorder %s20, 1
      %p38 = por %p36, %p37
      %p39 = scmp.ne.s32.totalorder %s28, %s29
      %p40 = scmp.eq.s32.totalorder %s20, 0
      %p41 = por %p39, %p40
      %p42 = scmp.ne.s32.totalorder %s28, %s29
      %p43 = scmp.eq.s32.totalorder %s21, 1
      %p44 = por %p42, %p43
      %p46 = scmp.ne.s32.totalorder %s29, %s45
      %p47 = scmp.eq.s32.totalorder %s21, 0
      %p48 = por %p46, %p47
      %s50 = sadd.s32 %s49, 1
      %p53 = scmp.eq.s32.totalorder %s15, 1
      %p54 = scmp.ne.s32.totalorder %s49, %s51
      %p55 = scmp.eq.s32.totalorder %s15, 0
      %p56 = por %p54, %p55
      %p57 = scmp.ne.s32.totalorder %s49, %s51
      %p58 = scmp.eq.s32.totalorder %s20, 1
      %p59 = por %p57, %p58
      %p60 = scmp.ne.s32.totalorder %s51, %s52
      %p61 = scmp.eq.s32.totalorder %s20, 0
      %p62 = por %p60, %p61
      %p63 = scmp.ne.s32.totalorder %s51, %s52
      %p64 = scmp.eq.s32.totalorder %s21, 1
      %p65 = por %p63, %p64
      %p67 = scmp.ne.s32.totalorder %s52, %s66
      %p68 = scmp.eq.s32.totalorder %s21, 0
      %p69 = por %p67, %p68
      %s70 = ssub.s32 %s15, %s22
      %p71 = scmp.eq.s32.totalorder %s70, 0
      %s73 = sadd.s32 %s72, 1
      %s74 = scalar_select %p71, %s72, %s73
      %p77 = pneg %p71
      %p78 = scmp.eq.s32.totalorder %s15, 1
      %p79 = por %p77, %p78
      %p80 = scmp.ne.s32.totalorder %s72, %s75
      %p81 = scmp.eq.s32.totalorder %s15, 0
      %p82 = por %p80, %p81
      %p83 = scmp.ne.s32.totalorder %s72, %s75
      %p84 = scmp.eq.s32.totalorder %s20, 1
      %p85 = por %p83, %p84
      %p86 = scmp.ne.s32.totalorder %s75, %s76
      %p87 = scmp.eq.s32.totalorder %s20, 0
      %p88 = por %p86, %p87
      %p89 = scmp.ne.s32.totalorder %s75, %s76
      %p90 = scmp.eq.s32.totalorder %s21, 1
      %p91 = por %p89, %p90
      %p93 = scmp.ne.s32.totalorder %s76, %s92
      %p94 = scmp.eq.s32.totalorder %s21, 0
      %p95 = por %p93, %p94
      %p96 = scmp.le.s32.totalorder 1, %s15
      %p97 = scmp.lt.s32.totalorder %s15, 3
      %p98 = pnand %p96, %p97
      %p99 = pneg %p98
      // Predicated region
      $region9: #{tpu_custom_call.1} parent=5 // pred_check
        _
      $region10: #{tpu_custom_call.1} parent=5 // pred_check_branch
        %101 = sbr.rel (%p98) target = $region12
      $region11: #{tpu_custom_call.1} parent=5 // pred_region
        %s102 = ssub.s32 %s15, 1
        // Predicated region
        $region13: #{tpu_custom_call.1} parent=11 // pred_check
          %p103 = pneg %p62
        $region14: #{tpu_custom_call.1} parent=11 // pred_check_branch
          %105 = sbr.rel (%p103) target = $region16
        $region15: #{tpu_custom_call.1} parent=11 // pred_region
          %s107 = ssub.s32 3072, 3072
          %108 = vsyncadd [#allocation6], %s107
          %s109 = sshll.u32 [#allocation5], 4
          %s110 = int_to_ptr.vmem [resolvable:$true] %s109
          %115 = dma.hbm_to_vmem [thread:$0]  %s1, 3072, %s110, [#allocation6], 128, 128, 8
        $region16: #{tpu_custom_call.1} parent=11 // pred_fallthru
          _
      $region12: #{tpu_custom_call.1} parent=5 // pred_fallthru
        _
      %p116 = scmp.lt.s32.totalorder %s15, 2
      // Predicated region
      $region17: #{tpu_custom_call.1} parent=5 // pred_check
        %p117 = pneg %p116
      $region18: #{tpu_custom_call.1} parent=5 // pred_check_branch
        %119 = sbr.rel (%p117) target = $region20
      $region19: #{tpu_custom_call.1} parent=5 // pred_region
        // Predicated region
        $region21: #{tpu_custom_call.1} parent=19 // pred_check
          %p120 = pneg %p35
        $region22: #{tpu_custom_call.1} parent=19 // pred_check_branch
          %122 = sbr.rel (%p120) target = $region24
        $region23: #{tpu_custom_call.1} parent=19 // pred_region
          %s123 = sand.u32 %s25, 1
          %s124 = scalar_lea.sflag [#allocation3], %s123
          %s125 = sand.u32 %s25, 1
          %s126 = smul.addr %s125, 16
          %s127 = scalar_lea.vmem [#allocation2], %s126
          %s129 = ssub.s32 256, 256
          %130 = vsyncadd %s124, %s129
          %s131 = smul.addr %s15, 2
          %s132 = smul.addr %s131, 128
          %s133 = scalar_lea.hbm %s0, %s132
          %s134 = sshll.u32 %s127, 4
          %s135 = int_to_ptr.vmem [resolvable:$true] %s134
          %140 = dma.hbm_to_vmem [thread:$0]  %s133, 256, %s135, %s124, 128, 128, 8
        $region24: #{tpu_custom_call.1} parent=19 // pred_fallthru
          _
      $region20: #{tpu_custom_call.1} parent=5 // pred_fallthru
        _
      %p141 = scmp.le.s32.totalorder 1, %s15
      %p142 = scmp.lt.s32.totalorder %s15, 3
      %p143 = pnand %p141, %p142
      %p144 = pneg %p143
      // Predicated region
      $region25: #{tpu_custom_call.1} parent=5 // pred_check
        _
      $region26: #{tpu_custom_call.1} parent=5 // pred_check_branch
        %146 = sbr.rel (%p143) target = $region28
      $region27: #{tpu_custom_call.1} parent=5 // pred_region
        %s147 = ssub.s32 %s15, 1
        %s148 = sand.u32 %s28, 1
        %s149 = scalar_lea.sflag [#allocation3], %s148
        %s150 = sand.u32 %s28, 1
        %s151 = smul.addr %s150, 16
        %s152 = scalar_lea.vmem [#allocation2], %s151
        // Predicated region
        $region29: #{tpu_custom_call.1} parent=27 // pred_check
          %p153 = pneg %p41
        $region30: #{tpu_custom_call.1} parent=27 // pred_check_branch
          %155 = sbr.rel (%p153) target = $region32
        $region31: #{tpu_custom_call.1} parent=27 // pred_region
          %156 = dma.done %s149, 256
        $region32: #{tpu_custom_call.1} parent=27 // pred_fallthru
          _
        // Predicated region
        $region33: #{tpu_custom_call.1} parent=27 // pred_check
          %p157 = pneg %p62
        $region34: #{tpu_custom_call.1} parent=27 // pred_check_branch
          %159 = sbr.rel (%p157) target = $region36
        $region35: #{tpu_custom_call.1} parent=27 // pred_region
          %160 = dma.done [#allocation6], 3072
        $region36: #{tpu_custom_call.1} parent=27 // pred_fallthru
          _
        %s161 = sand.u32 %s28, 1
        %s162 = scalar_lea.sflag [#allocation3], %s161
        %s163 = sand.u32 %s28, 1
        %s164 = smul.addr %s163, 16
        %s165 = scalar_lea.vmem [#allocation2], %s164
        %p166 = pneg %p41
        %p167 = pneg %p38
        %p168 = pneg %p62
        %p169 = pneg %p59
        %p170 = pneg %p88
        %p171 = pneg %p85
        %s172 = sand.u32 %s75, 1
        %s173 = scalar_lea.sflag [#allocation4], %s172
        %s174 = sand.u32 %s75, 1
        %s175 = smul.addr %s174, 16
        %s176 = scalar_lea.vmem [#allocation7], %s175
        %v177 = vld [vmem:[%s152] sm:$0xff]
        %v178 = vld [vmem:[%s152 + $0x8] sm:$0xff]
        %v179 = vld [vmem:[#allocation5] sm:$0xff]
        %v180 = vld [vmem:[#allocation5 + $0x8] sm:$0xff]
        %v181 = vld [vmem:[#allocation5 + $0x10] sm:$0xff]
        %v182 = vld [vmem:[#allocation5 + $0x18] sm:$0xff]
        %v183 = vld [vmem:[#allocation5 + $0x20] sm:$0xff]
        %v184 = vld [vmem:[#allocation5 + $0x28] sm:$0xff]
        %v185 = vld [vmem:[#allocation5 + $0x30] sm:$0xff]
        %v186 = vld [vmem:[#allocation5 + $0x38] sm:$0xff]
        %s187 = scalar_lea.vmem [#allocation5], 64
        %v188 = vld [vmem:[%s187] sm:$0xff]
        %v189 = vld [vmem:[%s187 + $0x8] sm:$0xff]
        %v190 = vld [vmem:[%s187 + $0x10] sm:$0xff]
        %v191 = vld [vmem:[%s187 + $0x18] sm:$0xff]
        %v192 = vld [vmem:[%s187 + $0x20] sm:$0xff]
        %v193 = vld [vmem:[%s187 + $0x28] sm:$0xff]
        %v194 = vld [vmem:[%s187 + $0x30] sm:$0xff]
        %v195 = vld [vmem:[%s187 + $0x38] sm:$0xff]
        %vm198 = vcmask 1046528
        %v199 = vrot.slane %v177, 1
        %v200 = vrot.slane %v178, 1
        %v201 = vsel %vm198, %v199, %v200
        %vm202 = vcmask 523264
        %v203 = vsel %vm202, %v201, 0
        %v205 = vsel %vm202, %v200, 0
        %207 = vmatprep.subr.mxu0 0.0
        %208 = vmatpush1.msra.mxu0 %v188
        %209 = vmatprep.subr.mxu0 0.0
        %210 = vmatpush1.msra.mxu0 %v189
        %211 = vmatprep.subr.mxu0 0.0
        %212 = vmatpush1.msra.mxu0 %v190
        %213 = vmatprep.subr.mxu0 0.0
        %214 = vmatpush1.msra.mxu0 %v191
        %215 = vmatprep.subr.mxu0 0.0
        %216 = vmatpush1.msra.mxu0 %v192
        %217 = vmatprep.subr.mxu0 0.0
        %218 = vmatpush1.msra.mxu0 %v193
        %219 = vmatprep.subr.mxu0 0.0
        %220 = vmatpush1.msra.mxu0 %v194
        %221 = vmatprep.subr.mxu0 0.0
        %222 = vmatpush1.msra.mxu0 %v195
        %223 = vmatprep.subr.mxu0 0.0
        %224 = vmatpush1.msra.mxu0 0.0
        %225 = vmatprep.subr.mxu0 0.0
        %226 = vmatpush1.msra.mxu0 0.0
        %227 = vmatprep.subr.mxu0 0.0
        %228 = vmatpush1.msra.mxu0 0.0
        %229 = vmatprep.subr.mxu0 0.0
        %230 = vmatpush1.msra.mxu0 0.0
        %231 = vmatprep.subr.mxu0 0.0
        %232 = vmatpush1.msra.mxu0 0.0
        %233 = vmatprep.subr.mxu0 0.0
        %234 = vmatpush1.msra.mxu0 0.0
        %235 = vmatprep.subr.mxu0 0.0
        %236 = vmatpush1.msra.mxu0 0.0
        %237 = vmatprep.subr.mxu0 0.0
        %238 = vmatpush1.msra.mxu0 0.0
        %239 = vmatprep.subr.mxu0 0.0
        %240 = vmatpush1.msra.mxu0 0.0
        %241 = vmatprep.subr.mxu0 0.0
        %242 = vmatpush1.msra.mxu0 0.0
        %243 = vmatprep.subr.mxu0 0.0
        %244 = vmatpush1.msra.mxu0 0.0
        %245 = vmatprep.subr.mxu0 0.0
        %246 = vmatpush1.msra.mxu0 0.0
        %247 = vmatprep.subr.mxu0 0.0
        %248 = vmatpush1.msra.mxu0 0.0
        %249 = vmatprep.subr.mxu0 0.0
        %250 = vmatpush1.msra.mxu0 0.0
        %251 = vmatprep.subr.mxu0 0.0
        %252 = vmatpush1.msra.mxu0 0.0
        %253 = vmatprep.subr.mxu0 0.0
        %254 = vmatpush1.msra.mxu0 0.0
        %255 = vmatprep.subr.mxu0 0.0
        %256 = vmatpush1.msra.mxu0 0.0
        %257 = vmatprep.subr.mxu0 0.0
        %258 = vmatpush1.msra.mxu0 0.0
        %259 = vmatprep.subr.mxu0 0.0
        %260 = vmatpush1.msra.mxu0 0.0
        %261 = vmatprep.subr.mxu0 0.0
        %262 = vmatpush1.msra.mxu0 0.0
        %263 = vmatprep.subr.mxu0 0.0
        %264 = vmatpush1.msra.mxu0 0.0
        %265 = vmatprep.subr.mxu0 0.0
        %266 = vmatpush1.msra.mxu0 0.0
        %267 = vmatprep.subr.mxu0 0.0
        %268 = vmatpush1.msra.mxu0 0.0
        %269 = vmatprep.subr.mxu0 0.0
        %270 = vmatpush1.msra.mxu0 0.0
        %271 = vmatprep.mubr.f32.mxu0 0.0
        %272 = vmatmul.mubr.f32.gmra.mrb[0].mxu0 %v203
        %v273 = vpop.f32.mrb[0].mxu0
        %v274 = vadd.f32 0.0, %v273
        %v275 = vpop.f32.mrb[0].mxu0
        %276 = vmatprep.mubr.f32.mxu0 0.0
        %277 = vmatmul.mubr.f32.gmra.mrb[0].mxu0 %v205
        %v278 = vpop.f32.mrb[0].mxu0
        %v279 = vadd.f32 0.0, %v278
        %v280 = vpop.f32.mrb[0].mxu0
        %281 = vdwg.mxu0
        %v282 = vsel %vm202, %v177, 0
        %v284 = vsel %vm202, %v178, 0
        %286 = vmatprep.subr.mxu0 0.0
        %287 = vmatpush1.msra.mxu0 %v179
        %288 = vmatprep.subr.mxu0 0.0
        %289 = vmatpush1.msra.mxu0 %v180
        %290 = vmatprep.subr.mxu0 0.0
        %291 = vmatpush1.msra.mxu0 %v181
        %292 = vmatprep.subr.mxu0 0.0
        %293 = vmatpush1.msra.mxu0 %v182
        %294 = vmatprep.subr.mxu0 0.0
        %295 = vmatpush1.msra.mxu0 %v183
        %296 = vmatprep.subr.mxu0 0.0
        %297 = vmatpush1.msra.mxu0 %v184
        %298 = vmatprep.subr.mxu0 0.0
        %299 = vmatpush1.msra.mxu0 %v185
        %300 = vmatprep.subr.mxu0 0.0
        %301 = vmatpush1.msra.mxu0 %v186
        %302 = vmatprep.subr.mxu0 0.0
        %303 = vmatpush1.msra.mxu0 0.0
        %304 = vmatprep.subr.mxu0 0.0
        %305 = vmatpush1.msra.mxu0 0.0
        %306 = vmatprep.subr.mxu0 0.0
        %307 = vmatpush1.msra.mxu0 0.0
        %308 = vmatprep.subr.mxu0 0.0
        %309 = vmatpush1.msra.mxu0 0.0
        %310 = vmatprep.subr.mxu0 0.0
        %311 = vmatpush1.msra.mxu0 0.0
        %312 = vmatprep.subr.mxu0 0.0
        %313 = vmatpush1.msra.mxu0 0.0
        %314 = vmatprep.subr.mxu0 0.0
        %315 = vmatpush1.msra.mxu0 0.0
        %316 = vmatprep.subr.mxu0 0.0
        %317 = vmatpush1.msra.mxu0 0.0
        %318 = vmatprep.subr.mxu0 0.0
        %319 = vmatpush1.msra.mxu0 0.0
        %320 = vmatprep.subr.mxu0 0.0
        %321 = vmatpush1.msra.mxu0 0.0
        %322 = vmatprep.subr.mxu0 0.0
        %323 = vmatpush1.msra.mxu0 0.0
        %324 = vmatprep.subr.mxu0 0.0
        %325 = vmatpush1.msra.mxu0 0.0
        %326 = vmatprep.subr.mxu0 0.0
        %327 = vmatpush1.msra.mxu0 0.0
        %328 = vmatprep.subr.mxu0 0.0
        %329 = vmatpush1.msra.mxu0 0.0
        %330 = vmatprep.subr.mxu0 0.0
        %331 = vmatpush1.msra.mxu0 0.0
        %332 = vmatprep.subr.mxu0 0.0
        %333 = vmatpush1.msra.mxu0 0.0
        %334 = vmatprep.subr.mxu0 0.0
        %335 = vmatpush1.msra.mxu0 0.0
        %336 = vmatprep.subr.mxu0 0.0
        %337 = vmatpush1.msra.mxu0 0.0
        %338 = vmatprep.subr.mxu0 0.0
        %339 = vmatpush1.msra.mxu0 0.0
        %340 = vmatprep.subr.mxu0 0.0
        %341 = vmatpush1.msra.mxu0 0.0
        %342 = vmatprep.subr.mxu0 0.0
        %343 = vmatpush1.msra.mxu0 0.0
        %344 = vmatprep.subr.mxu0 0.0
        %345 = vmatpush1.msra.mxu0 0.0
        %346 = vmatprep.subr.mxu0 0.0
        %347 = vmatpush1.msra.mxu0 0.0
        %348 = vmatprep.subr.mxu0 0.0
        %349 = vmatpush1.msra.mxu0 0.0
        %350 = vmatprep.mubr.f32.mxu0 0.0
        %351 = vmatmul.mubr.f32.gmra.mrb[0].mxu0 %v282
        %v352 = vpop.f32.mrb[0].mxu0
        %v353 = vadd.f32 %v274, %v352
        %v354 = vpop.f32.mrb[0].mxu0
        %355 = vmatprep.mubr.f32.mxu0 0.0
        %356 = vmatmul.mubr.f32.gmra.mrb[0].mxu0 %v284
        %v357 = vpop.f32.mrb[0].mxu0
        %v358 = vadd.f32 %v279, %v357
        %v359 = vpop.f32.mrb[0].mxu0
        %360 = vdwg.mxu0
        %s361 = scalar_lea.vmem [#allocation5], 128
        %v362 = vld [vmem:[%s361] sm:$0xff]
        %v363 = vld [vmem:[%s361 + $0x8] sm:$0xff]
        %v364 = vld [vmem:[%s361 + $0x10] sm:$0xff]
        %v365 = vld [vmem:[%s361 + $0x18] sm:$0xff]
        %v366 = vld [vmem:[%s361 + $0x20] sm:$0xff]
        %v367 = vld [vmem:[%s361 + $0x28] sm:$0xff]
        %v368 = vld [vmem:[%s361 + $0x30] sm:$0xff]
        %v369 = vld [vmem:[%s361 + $0x38] sm:$0xff]
        %vm370 = vcmask 1045504
        %v371 = vrot.slane %v177, 2
        %v372 = vrot.slane %v178, 2
        %v373 = vsel %vm370, %v371, %v372
        %v374 = vsel %vm202, %v373, 0
        %v376 = vsel %vm202, %v372, 0
        %378 = vmatprep.subr.mxu0 0.0
        %379 = vmatpush1.msra.mxu0 %v362
        %380 = vmatprep.subr.mxu0 0.0
        %381 = vmatpush1.msra.mxu0 %v363
        %382 = vmatprep.subr.mxu0 0.0
        %383 = vmatpush1.msra.mxu0 %v364
        %384 = vmatprep.subr.mxu0 0.0
        %385 = vmatpush1.msra.mxu0 %v365
        %386 = vmatprep.subr.mxu0 0.0
        %387 = vmatpush1.msra.mxu0 %v366
        %388 = vmatprep.subr.mxu0 0.0
        %389 = vmatpush1.msra.mxu0 %v367
        %390 = vmatprep.subr.mxu0 0.0
        %391 = vmatpush1.msra.mxu0 %v368
        %392 = vmatprep.subr.mxu0 0.0
        %393 = vmatpush1.msra.mxu0 %v369
        %394 = vmatprep.subr.mxu0 0.0
        %395 = vmatpush1.msra.mxu0 0.0
        %396 = vmatprep.subr.mxu0 0.0
        %397 = vmatpush1.msra.mxu0 0.0
        %398 = vmatprep.subr.mxu0 0.0
        %399 = vmatpush1.msra.mxu0 0.0
        %400 = vmatprep.subr.mxu0 0.0
        %401 = vmatpush1.msra.mxu0 0.0
        %402 = vmatprep.subr.mxu0 0.0
        %403 = vmatpush1.msra.mxu0 0.0
        %404 = vmatprep.subr.mxu0 0.0
        %405 = vmatpush1.msra.mxu0 0.0
        %406 = vmatprep.subr.mxu0 0.0
        %407 = vmatpush1.msra.mxu0 0.0
        %408 = vmatprep.subr.mxu0 0.0
        %409 = vmatpush1.msra.mxu0 0.0
        %410 = vmatprep.subr.mxu0 0.0
        %411 = vmatpush1.msra.mxu0 0.0
        %412 = vmatprep.subr.mxu0 0.0
        %413 = vmatpush1.msra.mxu0 0.0
        %414 = vmatprep.subr.mxu0 0.0
        %415 = vmatpush1.msra.mxu0 0.0
        %416 = vmatprep.subr.mxu0 0.0
        %417 = vmatpush1.msra.mxu0 0.0
        %418 = vmatprep.subr.mxu0 0.0
        %419 = vmatpush1.msra.mxu0 0.0
        %420 = vmatprep.subr.mxu0 0.0
        %421 = vmatpush1.msra.mxu0 0.0
        %422 = vmatprep.subr.mxu0 0.0
        %423 = vmatpush1.msra.mxu0 0.0
        %424 = vmatprep.subr.mxu0 0.0
        %425 = vmatpush1.msra.mxu0 0.0
        %426 = vmatprep.subr.mxu0 0.0
        %427 = vmatpush1.msra.mxu0 0.0
        %428 = vmatprep.subr.mxu0 0.0
        %429 = vmatpush1.msra.mxu0 0.0
        %430 = vmatprep.subr.mxu0 0.0
        %431 = vmatpush1.msra.mxu0 0.0
        %432 = vmatprep.subr.mxu0 0.0
        %433 = vmatpush1.msra.mxu0 0.0
        %434 = vmatprep.subr.mxu0 0.0
        %435 = vmatpush1.msra.mxu0 0.0
        %436 = vmatprep.subr.mxu0 0.0
        %437 = vmatpush1.msra.mxu0 0.0
        %438 = vmatprep.subr.mxu0 0.0
        %439 = vmatpush1.msra.mxu0 0.0
        %440 = vmatprep.subr.mxu0 0.0
        %441 = vmatpush1.msra.mxu0 0.0
        %442 = vmatprep.mubr.f32.mxu0 0.0
        %443 = vmatmul.mubr.f32.gmra.mrb[0].mxu0 %v374
        %v444 = vpop.f32.mrb[0].mxu0
        %v445 = vadd.f32 0.0, %v444
        %v446 = vpop.f32.mrb[0].mxu0
        %447 = vmatprep.mubr.f32.mxu0 0.0
        %448 = vmatmul.mubr.f32.gmra.mrb[0].mxu0 %v376
        %v449 = vpop.f32.mrb[0].mxu0
        %v450 = vadd.f32 0.0, %v449
        %v451 = vpop.f32.mrb[0].mxu0
        %452 = vdwg.mxu0
        %v453 = vadd.f32 %v353, %v445
        %v454 = vadd.f32 %v358, %v450
        %vm455 = vcmp.ge.f32.partialorder %v453, 0.0
        %vm456 = vcmp.ge.f32.partialorder %v454, 0.0
        %v457 = vmul.f32 %v453, 0.2
        %v458 = vmul.f32 %v454, 0.2
        %v459 = vsel %vm455, %v453, %v457
        %v460 = vsel %vm456, %v454, %v458
        %463 = vrot.lane.b32.xlu0 %v459, 120
        %v464 = vpop.permute.xlu0 %463
        %465 = vrot.lane.b32.xlu0 %v460, 120
        %v466 = vpop.permute.xlu0 %465
        %469 = vrot.lane.b32.xlu0 %v459, 8
        %v470 = vpop.permute.xlu0 %469
        %471 = vrot.lane.b32.xlu0 %v460, 8
        %v472 = vpop.permute.xlu0 %471
        %475 = vrot.lane.b32.xlu0 %v459, 24
        %v476 = vpop.permute.xlu0 %475
        %477 = vrot.lane.b32.xlu0 %v460, 24
        %v478 = vpop.permute.xlu0 %477
        %vm481 = vcmask 64512
        %v482 = vsel %vm481, %v464, %v470
        %v483 = vsel %vm481, %v466, %v472
        %vm484 = vcmask 982016
        %v485 = vsel %vm484, %v482, %v476
        %v486 = vsel %vm484, %v483, %v478
        %v488 = vrot.slane %v485, 1
        %vm491 = vcmask 1040384
        %v492 = vrot.slane %v485, 7
        %v493 = vrot.slane %v486, 7
        %v494 = vsel %vm491, %v492, %v493
        %v497 = vrot.slane %v486, 5
        %v499 = vsel %vm491, %v488, %v492
        %v500 = vsel %vm198, %v494, %v497
        %501 = vst [vmem:[%s176] sm:$0xff] %v499
        %502 = vst [vmem:[%s176 + $0x8] sm:$0xff] %v500
        %s503 = sand.u32 %s75, 1
        %s504 = scalar_lea.sflag [#allocation4], %s503
        %s505 = sand.u32 %s75, 1
        %s506 = smul.addr %s505, 16
        %s507 = scalar_lea.vmem [#allocation7], %s506
        // Predicated region
        $region37: #{tpu_custom_call.1} parent=27 // pred_check
          %p508 = pneg %p85
        $region38: #{tpu_custom_call.1} parent=27 // pred_check_branch
          %510 = sbr.rel (%p508) target = $region40
        $region39: #{tpu_custom_call.1} parent=27 // pred_region
          %s512 = ssub.s32 256, 256
          %513 = vsyncadd %s504, %s512
          %s514 = smul.addr %s20, 2
          %s515 = smul.addr %s514, 128
          %s516 = scalar_lea.hbm %s2, %s515
          %s517 = sshll.u32 %s507, 4
          %s518 = int_to_ptr.vmem [resolvable:$true] %s517
          %523 = dma.vmem_to_hbm [thread:$0]  %s518, 256, %s516, %s504, 128, 128, 8
        $region40: #{tpu_custom_call.1} parent=27 // pred_fallthru
          _
      $region28: #{tpu_custom_call.1} parent=5 // pred_fallthru
        _
      %p524 = scmp.le.s32.totalorder 2, %s15
      // Predicated region
      $region41: #{tpu_custom_call.1} parent=5 // pred_check
        %p525 = pneg %p524
      $region42: #{tpu_custom_call.1} parent=5 // pred_check_branch
        %527 = sbr.rel (%p525) target = $region44
      $region43: #{tpu_custom_call.1} parent=5 // pred_region
        %s528 = ssub.s32 %s15, 2
        // Predicated region
        $region45: #{tpu_custom_call.1} parent=43 // pred_check
          %p529 = pneg %p91
        $region46: #{tpu_custom_call.1} parent=43 // pred_check_branch
          %531 = sbr.rel (%p529) target = $region48
        $region47: #{tpu_custom_call.1} parent=43 // pred_region
          %s532 = sand.u32 %s76, 1
          %s533 = scalar_lea.sflag [#allocation4], %s532
          %s534 = sand.u32 %s76, 1
          %s535 = smul.addr %s534, 16
          %s536 = scalar_lea.vmem [#allocation7], %s535
          %537 = dma.done %s533, 256
        $region48: #{tpu_custom_call.1} parent=43 // pred_fallthru
          _
      $region44: #{tpu_custom_call.1} parent=5 // pred_fallthru
        _
    $region6: #{tpu_custom_call.1} parent=1 // loop_footer
      %s19 = sadd.s32 1, %s15
    $region7: #{tpu_custom_call.1} parent=1 // loop_footer_branch
      %14 = sbr.rel target = $region3
    $region8: #{tpu_custom_call.1} parent=1 // loop_exit
      _
    %538 = vsyncpa [#allocation3], 1
    %s539 = scalar_lea.sflag [#allocation3], 1
    %540 = vsyncpa %s539, 1
    %541 = vsyncpa [#allocation6], 1
    %542 = vsyncpa [#allocation4], 1
    %s543 = scalar_lea.sflag [#allocation4], 1
    %544 = vsyncpa %s543, 1

</llo_original>
